<compile_context>
chip_gen: v7x
topology: tpu7x:2x2x1
jax: 0.10.0
libtpu: 0.0.40
codegen_flags: <defaults>
</compile_context>

<pallas_src>
import functools

import jax
import jax.numpy as jnp
from jax.experimental import pallas as pl
from jax.experimental.pallas import tpu as pltpu


def _round_up(x: int, m: int) -> int:
    return (x + m - 1) // m * m


def _ce_kernel(labels_ref, logits_ref, loss_ref, m_sc, l_sc, t_sc, *, num_classes):
    """One (tn, tc) logits tile of the online cross-entropy reduction."""
    k = pl.program_id(1)

    @pl.when(k == 0)
    def _init():
        m_sc[...] = jnp.full_like(m_sc, -jnp.inf)
        l_sc[...] = jnp.zeros_like(l_sc)
        t_sc[...] = jnp.zeros_like(t_sc)

    logits = logits_ref[...].astype(jnp.float32)            # (tn, tc), f32 compute
    labels = labels_ref[...]                                 # (tn, 1) int32
    tn, tc = logits.shape

    # Global class indices for this tile; mask padded tail columns.
    col = jax.lax.broadcasted_iota(jnp.int32, (tn, tc), dimension=1) + k * tc
    valid = col < num_classes
    masked = jnp.where(valid, logits, jnp.float32(-1e30))

    # Online (flash-style) logsumexp update.
    tile_max = jnp.max(masked, axis=-1, keepdims=True)       # (tn, 1)
    m_prev = m_sc[...]
    m_new = jnp.maximum(m_prev, tile_max)
    alpha = jnp.exp(m_prev - m_new)                           # exp(-inf) = 0 on first tile
    p = jnp.where(valid, jnp.exp(masked - m_new), 0.0)
    l_sc[...] = alpha * l_sc[...] + jnp.sum(p, axis=-1, keepdims=True)
    m_sc[...] = m_new

    # Target-logit gather via one-hot compare (target falls in exactly one tile).
    onehot = col == labels
    t_sc[...] = t_sc[...] + jnp.sum(
        jnp.where(onehot, logits, 0.0), axis=-1, keepdims=True)

    @pl.when(k == pl.num_programs(1) - 1)
    def _finalize():
        loss_ref[...] = m_sc[...] + jnp.log(l_sc[...]) - t_sc[...]


def arcface_loss(logits: jax.Array, labels: jax.Array, *, tn=None, tc=None) -> jax.Array:
    """ArcFaceLoss forward pass: cross entropy with mean reduction (Pallas TPU)."""
    n, c = logits.shape

    # Tile sizes: sublane-aligned batch tile, lane-aligned class tile.
    if tn is None:
        tn = min(256, _round_up(n, 8))
    if tc is None:
        tc = min(4096, _round_up(c, 128))
    tn = _round_up(tn, 8)
    tc = _round_up(tc, 128)

    n_pad = _round_up(n, tn)
    c_pad = _round_up(c, tc)

    logits_p = logits
    if (n_pad, c_pad) != (n, c):
        logits_p = jnp.pad(logits, ((0, n_pad - n), (0, c_pad - c)))
    labels_p = labels.astype(jnp.int32)
    if n_pad != n:
        labels_p = jnp.pad(labels_p, (0, n_pad - n))
    labels_p = labels_p.reshape(n_pad, 1)

    grid = (n_pad // tn, c_pad // tc)

    per_example = pl.pallas_call(
        functools.partial(_ce_kernel, num_classes=c),
        out_shape=jax.ShapeDtypeStruct((n_pad, 1), jnp.float32),
        grid_spec=pltpu.PrefetchScalarGridSpec(
            num_scalar_prefetch=0,
            grid=grid,
            in_specs=[
                # labels: resident across the class axis (no re-DMA per class tile)
                pl.BlockSpec((tn, 1), lambda i, k: (i, 0)),
                # logits: streamed, auto double-buffered by BlockSpec pipelining
                pl.BlockSpec((tn, tc), lambda i, k: (i, k)),
            ],
            out_specs=pl.BlockSpec((tn, 1), lambda i, k: (i, 0)),
            scratch_shapes=[
                pltpu.VMEM((tn, 1), jnp.float32),   # running row max
                pltpu.VMEM((tn, 1), jnp.float32),   # running sum-exp (rescaled)
                pltpu.VMEM((tn, 1), jnp.float32),   # accumulated target logit
            ],
        ),
        compiler_params=pltpu.CompilerParams(
            dimension_semantics=("parallel", "arbitrary"),
            vmem_limit_bytes=48 * 1024 * 1024,   # safe on v5e/v6e (128 MiB) and v7x (64 MiB)
        ),
    )(labels_p, logits_p)

    # Drop padded rows, final mean reduction in the wrapper (keeps batch axis parallel).
    return jnp.mean(per_example[:n, 0])


if __name__ == "__main__":
    key = jax.random.PRNGKey(0)
    k_logits, k_labels = jax.random.split(key)

    # Small, deliberately non-aligned shapes to exercise tiling + tail masking.
    N, C = 12, 300
    logits = jax.random.normal(k_logits, (N, C), dtype=jnp.float32)
    labels = jax.random.randint(k_labels, (N,), 0, C, dtype=jnp.int32)

    # Pure-JAX reference (same semantics as F.cross_entropy, mean reduction).
    ref = jnp.mean(
        jax.nn.logsumexp(logits, axis=-1)
        - jnp.take_along_axis(logits, labels[:, None], axis=-1)[:, 0])

    # Small tiles force multiple class tiles -> exercises the online LSE path.
    loss = arcface_loss(logits, labels, tn=8, tc=128)
    jax.block_until_ready(loss)
    assert jnp.allclose(loss, ref, atol=1e-5, rtol=1e-5), (loss, ref)

    # Default tiling (single class tile at this toy size).
    loss2 = arcface_loss(logits, labels)
    jax.block_until_ready(loss2)
    assert jnp.allclose(loss2, ref, atol=1e-5, rtol=1e-5), (loss2, ref)

    # bf16 logits at the boundary, f32 compute inside the kernel.
    loss_bf16 = arcface_loss(logits.astype(jnp.bfloat16), labels, tn=8, tc=128)
    jax.block_until_ready(loss_bf16)
    assert jnp.allclose(loss_bf16, ref, atol=5e-2, rtol=5e-2), (loss_bf16, ref)

    print("KERNEL_OK")
</pallas_src>

<mosaic_0001>
module attributes {stable_mosaic.version = 11 : i64} {
  func.func @_ce_kernel(%arg0: i32, %arg1: i32, %arg2: memref<8x1xi32, #tpu.memory_space<vmem>>, %arg3: memref<8x128xf32, #tpu.memory_space<vmem>>, %arg4: memref<8x1xf32, #tpu.memory_space<vmem>>, %arg5: memref<8x1xf32, #tpu.memory_space<vmem>>, %arg6: memref<8x1xf32, #tpu.memory_space<vmem>>, %arg7: memref<8x1xf32, #tpu.memory_space<vmem>>) attributes {dimension_semantics = [#tpu.dimension_semantics<parallel>, #tpu.dimension_semantics<arbitrary>], iteration_bounds = array<i64: 2, 3>, scalar_prefetch = 0 : i64, scratch_operands = 3 : i64, tpu.core_type = #tpu.core_type<tc>, window_params = [{transform_indices = @transform_0, window_bounds = array<i64: 8, 1>}, {transform_indices = @transform_1, window_bounds = array<i64: 8, 128>}, {transform_indices = @transform_2, window_bounds = array<i64: 8, 1>}]} {
    %c0_i32 = arith.constant 0 : i32
    %0 = arith.cmpi eq, %arg1, %c0_i32 : i32
    %1 = arith.extui %0 : i1 to i32
    %c0_i32_0 = arith.constant 0 : i32
    %2 = arith.cmpi ne, %1, %c0_i32_0 : i32
    scf.if %2 {
      %cst_22 = arith.constant 0xFF800000 : f32
      %43 = vector.broadcast %cst_22 : f32 to vector<8x1xf32>
      %c0_23 = arith.constant 0 : index
      %c0_24 = arith.constant 0 : index
      %44 = vector.load %arg5[%c0_23, %c0_24] : memref<8x1xf32, #tpu.memory_space<vmem>>, vector<8x1xf32>
      tpu.vector_store %arg5[%c0_23, %c0_24], %43 {strides = array<i32>} : memref<8x1xf32, #tpu.memory_space<vmem>>, vector<8x1xf32>,
      %cst_25 = arith.constant 0.000000e+00 : f32
      %45 = vector.broadcast %cst_25 : f32 to vector<8x1xf32>
      %c0_26 = arith.constant 0 : index
      %c0_27 = arith.constant 0 : index
      %46 = vector.load %arg6[%c0_26, %c0_27] : memref<8x1xf32, #tpu.memory_space<vmem>>, vector<8x1xf32>
      tpu.vector_store %arg6[%c0_26, %c0_27], %45 {strides = array<i32>} : memref<8x1xf32, #tpu.memory_space<vmem>>, vector<8x1xf32>,
      %cst_28 = arith.constant 0.000000e+00 : f32
      %47 = vector.broadcast %cst_28 : f32 to vector<8x1xf32>
      %c0_29 = arith.constant 0 : index
      %c0_30 = arith.constant 0 : index
      %48 = vector.load %arg7[%c0_29, %c0_30] : memref<8x1xf32, #tpu.memory_space<vmem>>, vector<8x1xf32>
      tpu.vector_store %arg7[%c0_29, %c0_30], %47 {strides = array<i32>} : memref<8x1xf32, #tpu.memory_space<vmem>>, vector<8x1xf32>,
    } else {
    }
    %c0 = arith.constant 0 : index
    %c0_1 = arith.constant 0 : index
    %3 = vector.load %arg3[%c0, %c0_1] : memref<8x128xf32, #tpu.memory_space<vmem>>, vector<8x128xf32>
    %c0_2 = arith.constant 0 : index
    %c0_3 = arith.constant 0 : index
    %4 = vector.load %arg2[%c0_2, %c0_3] : memref<8x1xi32, #tpu.memory_space<vmem>>, vector<8x1xi32>
    %5 = tpu.iota {dimensions = array<i32: 1>} : vector<8x128xi32>
    %c128_i32 = arith.constant 128 : i32
    %6 = arith.muli %arg1, %c128_i32 : i32
    %7 = vector.broadcast %6 : i32 to vector<8x128xi32>
    %8 = arith.addi %5, %7 : vector<8x128xi32>
    %c300_i32 = arith.constant 300 : i32
    %9 = vector.broadcast %c300_i32 : i32 to vector<8x128xi32>
    %10 = arith.cmpi slt, %8, %9 : vector<8x128xi32>
    %cst = arith.constant -1.000000e+30 : f32
    %11 = vector.broadcast %cst : f32 to vector<8x128xf32>
    %12 = arith.select %10, %3, %11 : vector<8x128xi1>, vector<8x128xf32>
    %cst_4 = arith.constant dense<0xFF800000> : vector<8xf32>
    %13 = vector.multi_reduction <maximumf>, %12, %cst_4 [1] : vector<8x128xf32> to vector<8xf32>
    %14 = vector.shape_cast %13 : vector<8xf32> to vector<8x1xf32>
    %c0_5 = arith.constant 0 : index
    %c0_6 = arith.constant 0 : index
    %15 = vector.load %arg5[%c0_5, %c0_6] : memref<8x1xf32, #tpu.memory_space<vmem>>, vector<8x1xf32>
    %16 = arith.maximumf %15, %14 : vector<8x1xf32>
    %17 = arith.subf %15, %16 : vector<8x1xf32>
    %18 = math.exp %17 : vector<8x1xf32>
    %19 = vector.broadcast %16 : vector<8x1xf32> to vector<8x128xf32>
    %20 = arith.subf %12, %19 : vector<8x128xf32>
    %21 = math.exp %20 : vector<8x128xf32>
    %cst_7 = arith.constant 0.000000e+00 : f32
    %22 = vector.broadcast %cst_7 : f32 to vector<8x128xf32>
    %23 = arith.select %10, %21, %22 : vector<8x128xi1>, vector<8x128xf32>
    %c0_8 = arith.constant 0 : index
    %c0_9 = arith.constant 0 : index
    %24 = vector.load %arg6[%c0_8, %c0_9] : memref<8x1xf32, #tpu.memory_space<vmem>>, vector<8x1xf32>
    %25 = arith.mulf %18, %24 : vector<8x1xf32>
    %cst_10 = arith.constant dense<0.000000e+00> : vector<8xf32>
    %26 = vector.multi_reduction <add>, %23, %cst_10 [1] : vector<8x128xf32> to vector<8xf32>
    %27 = vector.shape_cast %26 : vector<8xf32> to vector<8x1xf32>
    %28 = arith.addf %25, %27 : vector<8x1xf32>
    %c0_11 = arith.constant 0 : index
    %c0_12 = arith.constant 0 : index
    %29 = vector.load %arg6[%c0_11, %c0_12] : memref<8x1xf32, #tpu.memory_space<vmem>>, vector<8x1xf32>
    tpu.vector_store %arg6[%c0_11, %c0_12], %28 {strides = array<i32>} : memref<8x1xf32, #tpu.memory_space<vmem>>, vector<8x1xf32>,
    %c0_13 = arith.constant 0 : index
    %c0_14 = arith.constant 0 : index
    %30 = vector.load %arg5[%c0_13, %c0_14] : memref<8x1xf32, #tpu.memory_space<vmem>>, vector<8x1xf32>
    tpu.vector_store %arg5[%c0_13, %c0_14], %16 {strides = array<i32>} : memref<8x1xf32, #tpu.memory_space<vmem>>, vector<8x1xf32>,
    %31 = vector.broadcast %4 : vector<8x1xi32> to vector<8x128xi32>
    %32 = arith.cmpi eq, %8, %31 : vector<8x128xi32>
    %c0_15 = arith.constant 0 : index
    %c0_16 = arith.constant 0 : index
    %33 = vector.load %arg7[%c0_15, %c0_16] : memref<8x1xf32, #tpu.memory_space<vmem>>, vector<8x1xf32>
    %cst_17 = arith.constant 0.000000e+00 : f32
    %34 = vector.broadcast %cst_17 : f32 to vector<8x128xf32>
    %35 = arith.select %32, %3, %34 : vector<8x128xi1>, vector<8x128xf32>
    %cst_18 = arith.constant dense<0.000000e+00> : vector<8xf32>
    %36 = vector.multi_reduction <add>, %35, %cst_18 [1] : vector<8x128xf32> to vector<8xf32>
    %37 = vector.shape_cast %36 : vector<8xf32> to vector<8x1xf32>
    %38 = arith.addf %33, %37 : vector<8x1xf32>
    %c0_19 = arith.constant 0 : index
    %c0_20 = arith.constant 0 : index
    %39 = vector.load %arg7[%c0_19, %c0_20] : memref<8x1xf32, #tpu.memory_space<vmem>>, vector<8x1xf32>
    tpu.vector_store %arg7[%c0_19, %c0_20], %38 {strides = array<i32>} : memref<8x1xf32, #tpu.memory_space<vmem>>, vector<8x1xf32>,
    %c2_i32 = arith.constant 2 : i32
    %40 = arith.cmpi eq, %arg1, %c2_i32 : i32
    %41 = arith.extui %40 : i1 to i32
    %c0_i32_21 = arith.constant 0 : i32
    %42 = arith.cmpi ne, %41, %c0_i32_21 : i32
    scf.if %42 {
      %c0_22 = arith.constant 0 : index
      %c0_23 = arith.constant 0 : index
      %43 = vector.load %arg5[%c0_22, %c0_23] : memref<8x1xf32, #tpu.memory_space<vmem>>, vector<8x1xf32>
      %c0_24 = arith.constant 0 : index
      %c0_25 = arith.constant 0 : index
      %44 = vector.load %arg6[%c0_24, %c0_25] : memref<8x1xf32, #tpu.memory_space<vmem>>, vector<8x1xf32>
      %45 = math.log %44 : vector<8x1xf32>
      %46 = arith.addf %43, %45 : vector<8x1xf32>
      %c0_26 = arith.constant 0 : index
      %c0_27 = arith.constant 0 : index
      %47 = vector.load %arg7[%c0_26, %c0_27] : memref<8x1xf32, #tpu.memory_space<vmem>>, vector<8x1xf32>
      %48 = arith.subf %46, %47 : vector<8x1xf32>
      %c0_28 = arith.constant 0 : index
      %c0_29 = arith.constant 0 : index
      %49 = vector.load %arg4[%c0_28, %c0_29] : memref<8x1xf32, #tpu.memory_space<vmem>>, vector<8x1xf32>
      tpu.vector_store %arg4[%c0_28, %c0_29], %48 {strides = array<i32>} : memref<8x1xf32, #tpu.memory_space<vmem>>, vector<8x1xf32>,
    } else {
    }
    return
  }
  func.func @transform_0(%arg0: i32, %arg1: i32) -> (i32, i32) {
    %c0_i32 = arith.constant 0 : i32
    %c0_i32_0 = arith.constant 0 : i32
    return %arg0, %c0_i32 : i32, i32
  }
  func.func @transform_1(%arg0: i32, %arg1: i32) -> (i32, i32) {
    %c0_i32 = arith.constant 0 : i32
    return %arg0, %arg1 : i32, i32
  }
  func.func @transform_2(%arg0: i32, %arg1: i32) -> (i32, i32) {
    %c0_i32 = arith.constant 0 : i32
    %c0_i32_0 = arith.constant 0 : i32
    return %arg0, %c0_i32 : i32, i32
  }
}

</mosaic_0001>

<llo_original>
// kernel: tpu_custom_call.1
$region0: #{tpu_custom_call.1}
  #allocation0 [shape = 'u32[]', space=smem, size = 0x4, offset = 0x4, fixed_abs, tag = 'smem constant byte address 0x4 - core index']
  #allocation1 [shape = 'u32[144,128]{1,0:T(1,128)}', space=vmem, size = 0x12000, scoped, tag = 'internal scratch']
  #allocation2 [shape = 'f32[8,1]{1,0:T(8,128)}', space=vmem, size = 0x1000, scoped, tag = 'scratch operand']
  #allocation3 [shape = 'f32[8,1]{1,0:T(8,128)}', space=vmem, size = 0x1000, scoped, tag = 'scratch operand']
  #allocation4 [shape = 'f32[8,1]{1,0:T(8,128)}', space=vmem, size = 0x1000, scoped, tag = 'scratch operand']
  %s0 = inlined_call_operand.vmem [shape: s32[16,1], index: 0, kind: input, shape index: {}]
  %s1 = inlined_call_operand.hbm [shape: f32[16,384], index: 1, kind: input, shape index: {}]
  %s2 = inlined_call_operand.vmem [shape: f32[16,1], index: 2, kind: output, shape index: {}]
  %s3 = sld [smem:[#allocation0]]
  $region53: #{tpu_custom_call.1} parent=0
    _
  %s5 = ssub.s32 1, %s3
  %s6 = scalar_select 0, %s5, %s3
  $region1: #{tpu_custom_call.1} parent=0
    #allocation5 [shape = 'u8[8192]{0}', space=vmem, size = 0x2000, scoped, tag = 'input window, operand 1']
    #allocation6 [shape = 's32[2]{0}', space=sflag, size = 0x8, scoped, tag = 'scoped memory for tpu_custom_call.1']
    %7 = vsyncpa [#allocation6], 0
    %s8 = scalar_lea.sflag [#allocation6], 1
    %9 = vsyncpa %s8, 0
    loop: start=0, step=1, limit=8
    $region2: #{tpu_custom_call.1} parent=1 // loop_pre_header
      _
    $region3: #{tpu_custom_call.1} parent=1 // loop_header
      %s11 = sphi 0, %s15
      %p12 = scmp.ge.s32.totalorder %s11, 8
      %s18 = sphi 0, %s30
      %s19 = sphi 0, %s26
      %s20 = sphi 0, %s18
      %s21 = sphi 0, %s19
      %s22 = sphi 0, %s20
      %s23 = sphi 0, %s21
      %s33 = sphi 0, %s35
      %s36 = sphi 0, %s33
      %s37 = sphi 0, %s36
      %s53 = sphi 0, %s37
      %s61 = sphi 0, %s63
      %s64 = sphi 0, %s61
      %s65 = sphi 0, %s64
      %s81 = sphi 0, %s65
      %s87 = sphi 0, %s89
      %s90 = sphi 0, %s87
      %s91 = sphi 0, %s90
      %s107 = sphi 0, %s91
    $region4: #{tpu_custom_call.1} parent=1 // loop_header_branch
      %14 = sbr.rel (%p12) target = $region8
    $region5: #{tpu_custom_call.1} parent=1 // loop_body
      %s16 = ssub.s32 %s11, 1
      %s17 = ssub.s32 %s11, 2
      %s24 = sadd.s32 1, %s19
      %p25 = scmp.ge.s32.totalorder %s24, 3
      %s26 = scalar_select %p25, 0, %s24
      %s27 = sadd.s32 1, %s18
      %s28 = scalar_select %p25, %s27, %s18
      %p29 = scmp.ge.s32.totalorder %s28, 2
      %s30 = scalar_select %p29, 0, %s28
      %s31 = ssub.s32 %s18, %s30
      %p32 = scmp.eq.s32.totalorder %s31, 0
      %s34 = sadd.s32 %s33, 1
      %s35 = scalar_select %p32, %s33, %s34
      %p38 = pneg %p32
      %p39 = scmp.eq.s32.totalorder %s11, 5
      %p40 = por %p38, %p39
      %p41 = scmp.ne.s32.totalorder %s33, %s36
      %p42 = scmp.eq.s32.totalorder %s11, 0
      %p43 = por %p41, %p42
      %p44 = scmp.ne.s32.totalorder %s33, %s36
      %p45 = scmp.eq.s32.totalorder %s16, 5
      %p46 = por %p44, %p45
      %p47 = scmp.ne.s32.totalorder %s36, %s37
      %p48 = scmp.eq.s32.totalorder %s16, 0
      %p49 = por %p47, %p48
      %p50 = scmp.ne.s32.totalorder %s36, %s37
      %p51 = scmp.eq.s32.totalorder %s17, 5
      %p52 = por %p50, %p51
      %p54 = scmp.ne.s32.totalorder %s37, %s53
      %p55 = scmp.eq.s32.totalorder %s17, 0
      %p56 = por %p54, %p55
      %s57 = ssub.s32 %s18, %s30
      %s58 = ssub.s32 %s19, %s26
      %s59 = sor.u32 %s57, %s58
      %p60 = scmp.eq.s32.totalorder %s59, 0
      %s62 = sadd.s32 %s61, 1
      %s63 = scalar_select %p60, %s61, %s62
      %p66 = pneg %p60
      %p67 = scmp.eq.s32.totalorder %s11, 5
      %p68 = por %p66, %p67
      %p69 = scmp.ne.s32.totalorder %s61, %s64
      %p70 = scmp.eq.s32.totalorder %s11, 0
      %p71 = por %p69, %p70
      %p72 = scmp.ne.s32.totalorder %s61, %s64
      %p73 = scmp.eq.s32.totalorder %s16, 5
      %p74 = por %p72, %p73
      %p75 = scmp.ne.s32.totalorder %s64, %s65
      %p76 = scmp.eq.s32.totalorder %s16, 0
      %p77 = por %p75, %p76
      %p78 = scmp.ne.s32.totalorder %s64, %s65
      %p79 = scmp.eq.s32.totalorder %s17, 5
      %p80 = por %p78, %p79
      %p82 = scmp.ne.s32.totalorder %s65, %s81
      %p83 = scmp.eq.s32.totalorder %s17, 0
      %p84 = por %p82, %p83
      %s85 = ssub.s32 %s18, %s30
      %p86 = scmp.eq.s32.totalorder %s85, 0
      %s88 = sadd.s32 %s87, 1
      %s89 = scalar_select %p86, %s87, %s88
      %p92 = pneg %p86
      %p93 = scmp.eq.s32.totalorder %s11, 5
      %p94 = por %p92, %p93
      %p95 = scmp.ne.s32.totalorder %s87, %s90
      %p96 = scmp.eq.s32.totalorder %s11, 0
      %p97 = por %p95, %p96
      %p98 = scmp.ne.s32.totalorder %s87, %s90
      %p99 = scmp.eq.s32.totalorder %s16, 5
      %p100 = por %p98, %p99
      %p101 = scmp.ne.s32.totalorder %s90, %s91
      %p102 = scmp.eq.s32.totalorder %s16, 0
      %p103 = por %p101, %p102
      %p104 = scmp.ne.s32.totalorder %s90, %s91
      %p105 = scmp.eq.s32.totalorder %s17, 5
      %p106 = por %p104, %p105
      %p108 = scmp.ne.s32.totalorder %s91, %s107
      %p109 = scmp.eq.s32.totalorder %s17, 0
      %p110 = por %p108, %p109
      %p111 = scmp.le.s32.totalorder 1, %s11
      %p112 = scmp.lt.s32.totalorder %s11, 7
      %p113 = pnand %p111, %p112
      %p114 = pneg %p113
      // Predicated region
      $region9: #{tpu_custom_call.1} parent=5 // pred_check
        _
      $region10: #{tpu_custom_call.1} parent=5 // pred_check_branch
        %116 = sbr.rel (%p113) target = $region12
      $region11: #{tpu_custom_call.1} parent=5 // pred_region
        %s117 = ssub.s32 %s11, 1
      $region12: #{tpu_custom_call.1} parent=5 // pred_fallthru
        _
      %p118 = scmp.lt.s32.totalorder %s11, 6
      // Predicated region
      $region13: #{tpu_custom_call.1} parent=5 // pred_check
        %p119 = pneg %p118
      $region14: #{tpu_custom_call.1} parent=5 // pred_check_branch
        %121 = sbr.rel (%p119) target = $region16
      $region15: #{tpu_custom_call.1} parent=5 // pred_region
        // Predicated region
        $region17: #{tpu_custom_call.1} parent=15 // pred_check
          %p122 = pneg %p43
        $region18: #{tpu_custom_call.1} parent=15 // pred_check_branch
          %124 = sbr.rel (%p122) target = $region20
        $region19: #{tpu_custom_call.1} parent=15 // pred_region
          %p125 = scmp.lt.s32.totalorder %s18, 1
          %s126 = scalar_select %p125, %s18, 1
          %s127 = smul.addr %s126, 8
          %s128 = scalar_lea.vmem %s0, %s127
        $region20: #{tpu_custom_call.1} parent=15 // pred_fallthru
          _
        // Predicated region
        $region21: #{tpu_custom_call.1} parent=15 // pred_check
          %p129 = pneg %p71
        $region22: #{tpu_custom_call.1} parent=15 // pred_check_branch
          %131 = sbr.rel (%p129) target = $region24
        $region23: #{tpu_custom_call.1} parent=15 // pred_region
          %s132 = sand.u32 %s61, 1
          %s133 = scalar_lea.sflag [#allocation6], %s132
          %s134 = sand.u32 %s61, 1
          %s135 = smul.addr %s134, 8
          %s136 = scalar_lea.vmem [#allocation5], %s135
          %s138 = ssub.s32 128, 128
          %139 = vsyncadd %s133, %s138
          %s140 = smul.addr %s18, 3
          %s141 = sadd.s32 %s19, %s140
          %s142 = smul.addr %s141, 128
          %s143 = scalar_lea.hbm %s1, %s142
          %s145 = sshll.u32 %s136, 4
          %s146 = int_to_ptr.vmem [resolvable:$true] %s145
          %148 = dma.hbm_to_vmem [thread:$0]  %s143, 128, %s146, %s133
        $region24: #{tpu_custom_call.1} parent=15 // pred_fallthru
          _
      $region16: #{tpu_custom_call.1} parent=5 // pred_fallthru
        _
      %p149 = scmp.le.s32.totalorder 1, %s11
      %p150 = scmp.lt.s32.totalorder %s11, 7
      %p151 = pnand %p149, %p150
      %p152 = pneg %p151
      // Predicated region
      $region25: #{tpu_custom_call.1} parent=5 // pred_check
        _
      $region26: #{tpu_custom_call.1} parent=5 // pred_check_branch
        %154 = sbr.rel (%p151) target = $region28
      $region27: #{tpu_custom_call.1} parent=5 // pred_region
        %s155 = ssub.s32 %s11, 1
        %s156 = sand.u32 %s64, 1
        %s157 = scalar_lea.sflag [#allocation6], %s156
        %s158 = sand.u32 %s64, 1
        %s159 = smul.addr %s158, 8
        %s160 = scalar_lea.vmem [#allocation5], %s159
        // Predicated region
        $region29: #{tpu_custom_call.1} parent=27 // pred_check
          %p161 = pneg %p77
        $region30: #{tpu_custom_call.1} parent=27 // pred_check_branch
          %163 = sbr.rel (%p161) target = $region32
        $region31: #{tpu_custom_call.1} parent=27 // pred_region
          %164 = dma.done %s157, 128
        $region32: #{tpu_custom_call.1} parent=27 // pred_fallthru
          _
        %p165 = scmp.lt.s32.totalorder %s20, 1
        %s166 = scalar_select %p165, %s20, 1
        %s167 = smul.addr %s166, 8
        %s168 = scalar_lea.vmem %s0, %s167
        %p169 = pneg %p49
        %p170 = pneg %p46
        %s171 = sand.u32 %s64, 1
        %s172 = scalar_lea.sflag [#allocation6], %s171
        %s173 = sand.u32 %s64, 1
        %s174 = smul.addr %s173, 8
        %s175 = scalar_lea.vmem [#allocation5], %s174
        %p176 = pneg %p77
        %p177 = pneg %p74
        %p178 = pneg %p103
        %p179 = pneg %p100
        %p180 = scmp.lt.s32.totalorder %s20, 1
        %s181 = scalar_select %p180, %s20, 1
        %s182 = smul.addr %s181, 8
        %s183 = scalar_lea.vmem %s2, %s182
        %p184 = scmp.lt.s32.totalorder %s20, 1
        %s185 = scalar_select %p184, %s20, 1
        %s186 = smul.addr %s185, 8
        %s187 = scalar_lea.vmem %s0, %s186
        %p188 = scmp.lt.s32.totalorder %s20, 1
        %s189 = scalar_select %p188, %s20, 1
        %s190 = smul.addr %s189, 8
        %s191 = scalar_lea.vmem %s2, %s190
        %p192 = scmp.eq.s32.totalorder %s21, 0
        // Predicated region
        $region33: #{tpu_custom_call.1} parent=27 // pred_check
          %p193 = pneg %p192
        $region34: #{tpu_custom_call.1} parent=27 // pred_check_branch
          %195 = sbr.rel (%p193) target = $region36
        $region35: #{tpu_custom_call.1} parent=27 // pred_region
          %vm196 = vcmask 7168
          %197 = vst.msk [vmem:[#allocation2] sm:$0xff] %vm196, -inf
          %198 = vst.msk [vmem:[#allocation3] sm:$0xff] %vm196, 0.0
          %199 = vst.msk [vmem:[#allocation4] sm:$0xff] %vm196, 0.0
        $region36: #{tpu_custom_call.1} parent=27 // pred_fallthru
          _
        %v200 = vld [vmem:[%s160] sm:$0xff]
        %v201 = vld [vmem:[%s187] sm:$0xff]
        %v202 = vlaneseq
        %v203 = vand.u32 %v202, 127
        %s204 = smul.u32 %s21, 128
        %v205 = vstv %s204
        %v206 = vadd.s32 %v203, %v205
        %vm207 = vcmp.lt.s32.totalorder %v206, 300
        %v208 = vsel %vm207, %v200, -1e+30
        %209 = vmax.xlane.f32.xlu0 %v208
        %v210 = vpop.xlane.xlu0 %209
        %v211 = vld [vmem:[#allocation2] sm:$0xff]
        %v212 = vmax.f32 %v211, %v210
        %v213 = vsub.f32 %v211, %v212
        %v214 = vmul.f32 %v213, 1.442695
        %v215 = vpow.pop %v214
        %217 = vset.pattern.permute.xlu0 0
        %218 = vperm.xlu0 %217, %v212
        %v219 = vpop.permute.xlu0 %218
        %v221 = vsub.f32 %v208, %v219
        %v222 = vmul.f32 %v221, 1.442695
        %v223 = vpow.pop %v222
        %v224 = vsel %vm207, %v223, 0.0
        %v225 = vld [vmem:[#allocation3] sm:$0xff]
        %v226 = vmul.f32 %v215, %v225
        %227 = vadd.xlane.f32.xlu0 %v224
        %v228 = vpop.xlane.xlu0 %227
        %v229 = vadd.f32 %v226, %v228
        %vm230 = vcmask 7168
        %231 = vst.msk [vmem:[#allocation3] sm:$0xff] %vm230, %v229
        %232 = vst.msk [vmem:[#allocation2] sm:$0xff] %vm230, %v212
        %233 = vset.pattern.permute.xlu0 0
        %234 = vperm.xlu0 %233, %v201
        %v235 = vpop.permute.xlu0 %234
        %vm236 = vcmp.eq.s32.totalorder %v206, %v235
        %v237 = vld [vmem:[#allocation4] sm:$0xff]
        %v238 = vsel %vm236, %v200, 0.0
        %239 = vadd.xlane.f32.xlu0 %v238
        %v240 = vpop.xlane.xlu0 %239
        %v241 = vadd.f32 %v237, %v240
        %242 = vst.msk [vmem:[#allocation4] sm:$0xff] %vm230, %v241
        %p243 = scmp.eq.s32.totalorder %s21, 2
        // Predicated region
        $region37: #{tpu_custom_call.1} parent=27 // pred_check
          %p244 = pneg %p243
        $region38: #{tpu_custom_call.1} parent=27 // pred_check_branch
          %246 = sbr.rel (%p244) target = $region40
        $region39: #{tpu_custom_call.1} parent=27 // pred_region
          %v247 = vld [vmem:[#allocation2] sm:$0xff]
          %v248 = vld [vmem:[#allocation3] sm:$0xff]
          %v249 = vlog2.pop %v248
          %v250 = vmul.f32 %v249, 0.6931472
          %v251 = vadd.f32 %v247, %v250
          %v252 = vld [vmem:[#allocation4] sm:$0xff]
          %v253 = vsub.f32 %v251, %v252
          %254 = vst.msk [vmem:[%s191] sm:$0xff] %vm230, %v253
        $region40: #{tpu_custom_call.1} parent=27 // pred_fallthru
          _
        %p255 = scmp.lt.s32.totalorder %s20, 1
        %s256 = scalar_select %p255, %s20, 1
        %s257 = smul.addr %s256, 8
        %s258 = scalar_lea.vmem %s2, %s257
        // Predicated region
        $region41: #{tpu_custom_call.1} parent=27 // pred_check
          %p259 = pneg %p100
        $region42: #{tpu_custom_call.1} parent=27 // pred_check_branch
          %261 = sbr.rel (%p259) target = $region44
        $region43: #{tpu_custom_call.1} parent=27 // pred_region
          _
        $region44: #{tpu_custom_call.1} parent=27 // pred_fallthru
          _
      $region28: #{tpu_custom_call.1} parent=5 // pred_fallthru
        _
      %p262 = scmp.le.s32.totalorder 2, %s11
      // Predicated region
      $region45: #{tpu_custom_call.1} parent=5 // pred_check
        %p263 = pneg %p262
      $region46: #{tpu_custom_call.1} parent=5 // pred_check_branch
        %265 = sbr.rel (%p263) target = $region48
      $region47: #{tpu_custom_call.1} parent=5 // pred_region
        %s266 = ssub.s32 %s11, 2
        // Predicated region
        $region49: #{tpu_custom_call.1} parent=47 // pred_check
          %p267 = pneg %p106
        $region50: #{tpu_custom_call.1} parent=47 // pred_check_branch
          %269 = sbr.rel (%p267) target = $region52
        $region51: #{tpu_custom_call.1} parent=47 // pred_region
          %p270 = scmp.lt.s32.totalorder %s22, 1
          %s271 = scalar_select %p270, %s22, 1
          %s272 = smul.addr %s271, 8
          %s273 = scalar_lea.vmem %s2, %s272
        $region52: #{tpu_custom_call.1} parent=47 // pred_fallthru
          _
      $region48: #{tpu_custom_call.1} parent=5 // pred_fallthru
        _
    $region6: #{tpu_custom_call.1} parent=1 // loop_footer
      %s15 = sadd.s32 1, %s11
    $region7: #{tpu_custom_call.1} parent=1 // loop_footer_branch
      %10 = sbr.rel target = $region3
    $region8: #{tpu_custom_call.1} parent=1 // loop_exit
      _
    %274 = vsyncpa [#allocation6], 1
    %s275 = scalar_lea.sflag [#allocation6], 1
    %276 = vsyncpa %s275, 1

</llo_original>
